<compile_context>
chip_gen: v7x
topology: tpu7x:2x2x1
jax: 0.10.0
libtpu: 0.0.40
codegen_flags: <defaults>
</compile_context>

<pallas_src>
import jax
import jax.numpy as jnp
from jax.experimental import pallas as pl
from jax.experimental.pallas import tpu as pltpu

NEG_SLOPE = 0.2  # LeakyReLU(0.2)

# Lazily-decided: does this JAX/Mosaic build accept pl.Buffered(1)?
_SINGLE_BUFFER_OK = None


def _leaky_relu(x):
    # 0 < slope < 1  =>  leaky_relu(x) == max(x, slope*x)
    return jnp.maximum(x, NEG_SLOPE * x)


def _round_up(v, m):
    return (v + m - 1) // m * m


# ------------------------------------------------------------------
# Fused Pallas kernel: fc1 -> lrelu -> fc2 -> lrelu
# ------------------------------------------------------------------
def _feedback_kernel(x_ref, w1_ref, b1_ref, w2_ref, b2_ref, o_ref):
    # fc1: bf16 x bf16 on the MXU, f32 accumulation; bias + lrelu in f32.
    x1 = jnp.dot(x_ref[...], w1_ref[...],
                 preferred_element_type=jnp.float32) + b1_ref[...]
    x1 = _leaky_relu(x1)
    # fc2: cast the activation back to bf16 for the MXU, accumulate in f32.
    h = jnp.dot(x1.astype(jnp.bfloat16), w2_ref[...],
                preferred_element_type=jnp.float32) + b2_ref[...]
    o_ref[...] = _leaky_relu(h)


# ------------------------------------------------------------------
# Parameter init (matches weights_init: Linear weight ~ N(0, 0.02), bias 0)
# ------------------------------------------------------------------
def init_params(key, ngh):
    kw1, kw2 = jax.random.split(key)
    return {
        "w1": 0.02 * jax.random.normal(kw1, (ngh, ngh), jnp.float32),
        "b1": jnp.zeros((ngh,), jnp.float32),
        "w2": 0.02 * jax.random.normal(kw2, (ngh, ngh), jnp.float32),
        "b2": jnp.zeros((ngh,), jnp.float32),
    }


def prepare_params(params):
    """Pad + cast parameters ONCE (hoisted out of the per-call forward)."""
    d = params["w1"].shape[0]
    dp = _round_up(d, 128)  # lane-dense feature dim
    w1 = jnp.zeros((dp, dp), jnp.bfloat16).at[:d, :d].set(
        params["w1"].astype(jnp.bfloat16))
    w2 = jnp.zeros((dp, dp), jnp.bfloat16).at[:d, :d].set(
        params["w2"].astype(jnp.bfloat16))
    b1 = jnp.zeros((1, dp), jnp.float32).at[0, :d].set(
        params["b1"].reshape(-1))
    b2 = jnp.zeros((1, dp), jnp.float32).at[0, :d].set(
        params["b2"].reshape(-1))
    return {"w1": w1, "b1": b1, "w2": w2, "b2": b2, "d": d, "dp": dp}


def _choose_row_tile(bp, dp, block_rows):
    """Pick the batch row tile (multiple of 8)."""
    if block_rows is None:
        # Small feature dims -> big row tiles to amortize per-step overhead.
        block_rows = 2048 if dp <= 256 else (1024 if dp <= 512 else 256)
    block_rows = max(8, _round_up(block_rows, 8))
    tm = min(block_rows, bp)
    # v7x megacore: ensure the "parallel" batch axis has >= 2 grid steps
    # whenever the batch allows it (harmless on single-TC v5e/v6e).
    if bp >= 16:
        tm = min(tm, _round_up(-(-bp // 2), 8))
    return tm


# ------------------------------------------------------------------
# Fused forward
# ------------------------------------------------------------------
def feedback_forward(pparams, x, *, block_rows=None):
    """Fused Feedback forward. x: [B, ngh] f32 -> [B, ngh] f32."""
    global _SINGLE_BUFFER_OK

    b, d = x.shape
    dp = pparams["dp"]
    assert d == pparams["d"], (d, pparams["d"])

    bp = _round_up(b, 8)                 # pad only to the 8-row sublane granule
    tm = _choose_row_tile(bp, dp, block_rows)
    grid = (-(-bp // tm),)               # cdiv; boundary block is masked by Pallas

    # x is the only tensor padded per call; bf16 halves its DMA traffic.
    xp = jnp.zeros((bp, dp), jnp.bfloat16).at[:b, :d].set(
        x.astype(jnp.bfloat16))

    # Explicit VMEM budget: x/out tiles double-buffered, weights single-
    # buffered, f32 temporaries, plus 2x headroom (clamped to v7x's 64 MiB).
    est = (2 * tm * dp * 2            # x tiles (bf16, double-buffered)
           + 2 * tm * dp * 4          # out tiles (f32, double-buffered)
           + 2 * tm * dp * 4          # x1 / h temporaries (f32)
           + 1 * 2 * dp * dp * 2      # w1 + w2 (bf16, single-buffered)
           + 2 * 2 * dp * 4)          # biases
    vmem_limit = int(min(64 << 20, max(2 * est, 16 << 20)))

    def run(single_buffer_weights):
        if single_buffer_weights:
            def wspec(shape):
                # Grid-invariant operands: no benefit from double buffering.
                return pl.BlockSpec(shape, lambda i: (0, 0),
                                    pipeline_mode=pl.Buffered(1))
        else:
            def wspec(shape):
                return pl.BlockSpec(shape, lambda i: (0, 0))

        return pl.pallas_call(
            _feedback_kernel,
            out_shape=jax.ShapeDtypeStruct((bp, dp), jnp.float32),
            grid_spec=pltpu.PrefetchScalarGridSpec(
                num_scalar_prefetch=0,
                grid=grid,
                in_specs=[
                    pl.BlockSpec((tm, dp), lambda i: (i, 0)),  # x row tile
                    wspec((dp, dp)),                           # w1 (resident)
                    wspec((1, dp)),                            # b1
                    wspec((dp, dp)),                           # w2 (resident)
                    wspec((1, dp)),                            # b2
                ],
                out_specs=pl.BlockSpec((tm, dp), lambda i: (i, 0)),
            ),
            compiler_params=pltpu.CompilerParams(
                dimension_semantics=("parallel",),
                vmem_limit_bytes=vmem_limit),
        )(xp, pparams["w1"], pparams["b1"], pparams["w2"], pparams["b2"])

    if _SINGLE_BUFFER_OK is None:
        try:
            out = run(True)
            _SINGLE_BUFFER_OK = True
        except Exception:            # pragma: no cover - depends on JAX build
            _SINGLE_BUFFER_OK = False
            out = run(False)
    else:
        out = run(_SINGLE_BUFFER_OK)

    # TODO(synk): when chaining with other padded Pallas layers, keep the
    # (bp, dp) padded layout and slice only at the network boundary.
    return out[:b, :d]


# ------------------------------------------------------------------
# Pure-JAX reference (for correctness check)
# ------------------------------------------------------------------
def _ref_forward(params, x):
    x1 = _leaky_relu(x @ params["w1"] + params["b1"])
    return _leaky_relu(x1 @ params["w2"] + params["b2"])


# ------------------------------------------------------------------
if __name__ == "__main__":
    key = jax.random.PRNGKey(0)
    kp, kx1, kx2 = jax.random.split(key, 3)

    ngh = 96     # opt.ngh (intentionally not lane-aligned -> padded to 128)
    params = init_params(kp, ngh)
    pparams = prepare_params(params)   # pad/cast ONCE, outside the forward

    # Case 1: tiny batch (single 8-row tile).
    x_small = jax.random.normal(kx1, (6, ngh), jnp.float32)
    out_small = jax.block_until_ready(feedback_forward(pparams, x_small))
    ref_small = _ref_forward(params, x_small)
    assert out_small.shape == (6, ngh), out_small.shape
    assert jnp.allclose(out_small, ref_small, atol=2e-2, rtol=2e-2), \
        float(jnp.max(jnp.abs(out_small - ref_small)))

    # Case 2: batch that doesn't divide the row tile (exercises the cdiv grid,
    # masked boundary block, and the >=2-step split for v7x megacore).
    x_big = jax.random.normal(kx2, (150, ngh), jnp.float32)
    out_big = jax.block_until_ready(feedback_forward(pparams, x_big))
    ref_big = _ref_forward(params, x_big)
    assert out_big.shape == (150, ngh), out_big.shape
    assert jnp.allclose(out_big, ref_big, atol=2e-2, rtol=2e-2), \
        float(jnp.max(jnp.abs(out_big - ref_big)))

    print("KERNEL_OK")
</pallas_src>

<mosaic_0001>
module attributes {stable_mosaic.version = 11 : i64} {
  func.func @_feedback_kernel(%arg0: i32, %arg1: memref<8x128xbf16, #tpu.memory_space<vmem>>, %arg2: memref<128x128xbf16, #tpu.memory_space<vmem>>, %arg3: memref<1x128xf32, #tpu.memory_space<vmem>>, %arg4: memref<128x128xbf16, #tpu.memory_space<vmem>>, %arg5: memref<1x128xf32, #tpu.memory_space<vmem>>, %arg6: memref<8x128xf32, #tpu.memory_space<vmem>>) attributes {dimension_semantics = [#tpu.dimension_semantics<parallel>], iteration_bounds = array<i64: 1>, scalar_prefetch = 0 : i64, scratch_operands = 0 : i64, tpu.core_type = #tpu.core_type<tc>, window_params = [{transform_indices = @transform_0, window_bounds = array<i64: 8, 128>}, {pipeline_mode = #tpu.pipeline_mode<synchronous>, transform_indices = @transform_1, window_bounds = array<i64: 128, 128>}, {pipeline_mode = #tpu.pipeline_mode<synchronous>, transform_indices = @transform_2, window_bounds = array<i64: 1, 128>}, {pipeline_mode = #tpu.pipeline_mode<synchronous>, transform_indices = @transform_3, window_bounds = array<i64: 128, 128>}, {pipeline_mode = #tpu.pipeline_mode<synchronous>, transform_indices = @transform_4, window_bounds = array<i64: 1, 128>}, {transform_indices = @transform_5, window_bounds = array<i64: 8, 128>}]} {
    %c0 = arith.constant 0 : index
    %c0_0 = arith.constant 0 : index
    %0 = vector.load %arg1[%c0, %c0_0] : memref<8x128xbf16, #tpu.memory_space<vmem>>, vector<8x128xbf16>
    %c0_1 = arith.constant 0 : index
    %c0_2 = arith.constant 0 : index
    %1 = vector.load %arg2[%c0_1, %c0_2] : memref<128x128xbf16, #tpu.memory_space<vmem>>, vector<128x128xbf16>
    %cst = arith.constant dense<0.000000e+00> : vector<8x128xf32>
    %2 = tpu.matmul %0, %1, %cst {dimension_numbers = #tpu.dot_dimension_numbers<[1], [0], [0], [1], [0, 0, 1, 1], [], []>} : vector<8x128xbf16>, vector<128x128xbf16>, vector<8x128xf32> -> vector<8x128xf32>
    %c0_3 = arith.constant 0 : index
    %c0_4 = arith.constant 0 : index
    %3 = vector.load %arg3[%c0_3, %c0_4] : memref<1x128xf32, #tpu.memory_space<vmem>>, vector<1x128xf32>
    %4 = vector.broadcast %3 : vector<1x128xf32> to vector<8x128xf32>
    %5 = arith.addf %2, %4 : vector<8x128xf32>
    %cst_5 = arith.constant 2.000000e-01 : f32
    %6 = vector.broadcast %cst_5 : f32 to vector<8x128xf32>
    %7 = arith.mulf %6, %5 : vector<8x128xf32>
    %8 = arith.maximumf %5, %7 : vector<8x128xf32>
    %9 = arith.truncf %8 : vector<8x128xf32> to vector<8x128xbf16>
    %c0_6 = arith.constant 0 : index
    %c0_7 = arith.constant 0 : index
    %10 = vector.load %arg4[%c0_6, %c0_7] : memref<128x128xbf16, #tpu.memory_space<vmem>>, vector<128x128xbf16>
    %cst_8 = arith.constant dense<0.000000e+00> : vector<8x128xf32>
    %11 = tpu.matmul %9, %10, %cst_8 {dimension_numbers = #tpu.dot_dimension_numbers<[1], [0], [0], [1], [0, 0, 1, 1], [], []>} : vector<8x128xbf16>, vector<128x128xbf16>, vector<8x128xf32> -> vector<8x128xf32>
    %c0_9 = arith.constant 0 : index
    %c0_10 = arith.constant 0 : index
    %12 = vector.load %arg5[%c0_9, %c0_10] : memref<1x128xf32, #tpu.memory_space<vmem>>, vector<1x128xf32>
    %13 = vector.broadcast %12 : vector<1x128xf32> to vector<8x128xf32>
    %14 = arith.addf %11, %13 : vector<8x128xf32>
    %cst_11 = arith.constant 2.000000e-01 : f32
    %15 = vector.broadcast %cst_11 : f32 to vector<8x128xf32>
    %16 = arith.mulf %15, %14 : vector<8x128xf32>
    %17 = arith.maximumf %14, %16 : vector<8x128xf32>
    %c0_12 = arith.constant 0 : index
    %c0_13 = arith.constant 0 : index
    %18 = vector.load %arg6[%c0_12, %c0_13] : memref<8x128xf32, #tpu.memory_space<vmem>>, vector<8x128xf32>
    tpu.vector_store %arg6[%c0_12, %c0_13], %17 {strides = array<i32>} : memref<8x128xf32, #tpu.memory_space<vmem>>, vector<8x128xf32>,
    return
  }
  func.func @transform_0(%arg0: i32) -> (i32, i32) {
    %c0_i32 = arith.constant 0 : i32
    %c0_i32_0 = arith.constant 0 : i32
    return %arg0, %c0_i32 : i32, i32
  }
  func.func @transform_1(%arg0: i32) -> (i32, i32) {
    %c0_i32 = arith.constant 0 : i32
    %c0_i32_0 = arith.constant 0 : i32
    %c0_i32_1 = arith.constant 0 : i32
    return %c0_i32, %c0_i32_0 : i32, i32
  }
  func.func @transform_2(%arg0: i32) -> (i32, i32) {
    %c0_i32 = arith.constant 0 : i32
    %c0_i32_0 = arith.constant 0 : i32
    %c0_i32_1 = arith.constant 0 : i32
    return %c0_i32, %c0_i32_0 : i32, i32
  }
  func.func @transform_3(%arg0: i32) -> (i32, i32) {
    %c0_i32 = arith.constant 0 : i32
    %c0_i32_0 = arith.constant 0 : i32
    %c0_i32_1 = arith.constant 0 : i32
    return %c0_i32, %c0_i32_0 : i32, i32
  }
  func.func @transform_4(%arg0: i32) -> (i32, i32) {
    %c0_i32 = arith.constant 0 : i32
    %c0_i32_0 = arith.constant 0 : i32
    %c0_i32_1 = arith.constant 0 : i32
    return %c0_i32, %c0_i32_0 : i32, i32
  }
  func.func @transform_5(%arg0: i32) -> (i32, i32) {
    %c0_i32 = arith.constant 0 : i32
    %c0_i32_0 = arith.constant 0 : i32
    return %arg0, %c0_i32 : i32, i32
  }
}

module attributes {stable_mosaic.version = 11 : i64} {
  func.func @_feedback_kernel(%arg0: i32, %arg1: memref<8x128xbf16, #tpu.memory_space<vmem>>, %arg2: memref<128x128xbf16, #tpu.memory_space<vmem>>, %arg3: memref<1x128xf32, #tpu.memory_space<vmem>>, %arg4: memref<128x128xbf16, #tpu.memory_space<vmem>>, %arg5: memref<1x128xf32, #tpu.memory_space<vmem>>, %arg6: memref<8x128xf32, #tpu.memory_space<vmem>>) attributes {dimension_semantics = [#tpu.dimension_semantics<parallel>], iteration_bounds = array<i64: 1>, scalar_prefetch = 0 : i64, scratch_operands = 0 : i64, tpu.core_type = #tpu.core_type<tc>, window_params = [{transform_indices = @transform_0, window_bounds = array<i64: 8, 128>}, {pipeline_mode = #tpu.pipeline_mode<synchronous>, transform_indices = @transform_1, window_bounds = array<i64: 128, 128>}, {pipeline_mode = #tpu.pipeline_mode<synchronous>, transform_indices = @transform_2, window_bounds = array<i64: 1, 128>}, {pipeline_mode = #tpu.pipeline_mode<synchronous>, transform_indices = @transform_3, window_bounds = array<i64: 128, 128>}, {pipeline_mode = #tpu.pipeline_mode<synchronous>, transform_indices = @transform_4, window_bounds = array<i64: 1, 128>}, {transform_indices = @transform_5, window_bounds = array<i64: 8, 128>}]} {
    %c0 = arith.constant 0 : index
    %c0_0 = arith.constant 0 : index
    %0 = vector.load %arg1[%c0, %c0_0] : memref<8x128xbf16, #tpu.memory_space<vmem>>, vector<8x128xbf16>
    %c0_1 = arith.constant 0 : index
    %c0_2 = arith.constant 0 : index
    %1 = vector.load %arg2[%c0_1, %c0_2] : memref<128x128xbf16, #tpu.memory_space<vmem>>, vector<128x128xbf16>
    %cst = arith.constant dense<0.000000e+00> : vector<8x128xf32>
    %2 = tpu.matmul %0, %1, %cst {dimension_numbers = #tpu.dot_dimension_numbers<[1], [0], [0], [1], [0, 0, 1, 1], [], []>} : vector<8x128xbf16>, vector<128x128xbf16>, vector<8x128xf32> -> vector<8x128xf32>
    %c0_3 = arith.constant 0 : index
    %c0_4 = arith.constant 0 : index
    %3 = vector.load %arg3[%c0_3, %c0_4] : memref<1x128xf32, #tpu.memory_space<vmem>>, vector<1x128xf32>
    %4 = vector.broadcast %3 : vector<1x128xf32> to vector<8x128xf32>
    %5 = arith.addf %2, %4 : vector<8x128xf32>
    %cst_5 = arith.constant 2.000000e-01 : f32
    %6 = vector.broadcast %cst_5 : f32 to vector<8x128xf32>
    %7 = arith.mulf %6, %5 : vector<8x128xf32>
    %8 = arith.maximumf %5, %7 : vector<8x128xf32>
    %9 = arith.truncf %8 : vector<8x128xf32> to vector<8x128xbf16>
    %c0_6 = arith.constant 0 : index
    %c0_7 = arith.constant 0 : index
    %10 = vector.load %arg4[%c0_6, %c0_7] : memref<128x128xbf16, #tpu.memory_space<vmem>>, vector<128x128xbf16>
    %cst_8 = arith.constant dense<0.000000e+00> : vector<8x128xf32>
    %11 = tpu.matmul %9, %10, %cst_8 {dimension_numbers = #tpu.dot_dimension_numbers<[1], [0], [0], [1], [0, 0, 1, 1], [], []>} : vector<8x128xbf16>, vector<128x128xbf16>, vector<8x128xf32> -> vector<8x128xf32>
    %c0_9 = arith.constant 0 : index
    %c0_10 = arith.constant 0 : index
    %12 = vector.load %arg5[%c0_9, %c0_10] : memref<1x128xf32, #tpu.memory_space<vmem>>, vector<1x128xf32>
    %13 = vector.broadcast %12 : vector<1x128xf32> to vector<8x128xf32>
    %14 = arith.addf %11, %13 : vector<8x128xf32>
    %cst_11 = arith.constant 2.000000e-01 : f32
    %15 = vector.broadcast %cst_11 : f32 to vector<8x128xf32>
    %16 = arith.mulf %15, %14 : vector<8x128xf32>
    %17 = arith.maximumf %14, %16 : vector<8x128xf32>
    %c0_12 = arith.constant 0 : index
    %c0_13 = arith.constant 0 : index
    %18 = vector.load %arg6[%c0_12, %c0_13] : memref<8x128xf32, #tpu.memory_space<vmem>>, vector<8x128xf32>
    tpu.vector_store %arg6[%c0_12, %c0_13], %17 {strides = array<i32>} : memref<8x128xf32, #tpu.memory_space<vmem>>, vector<8x128xf32>,
    return
  }
  func.func @transform_0(%arg0: i32) -> (i32, i32) {
    %c0_i32 = arith.constant 0 : i32
    %c0_i32_0 = arith.constant 0 : i32
    return %arg0, %c0_i32 : i32, i32
  }
  func.func @transform_1(%arg0: i32) -> (i32, i32) {
    %c0_i32 = arith.constant 0 : i32
    %c0_i32_0 = arith.constant 0 : i32
    %c0_i32_1 = arith.constant 0 : i32
    return %c0_i32, %c0_i32_0 : i32, i32
  }
  func.func @transform_2(%arg0: i32) -> (i32, i32) {
    %c0_i32 = arith.constant 0 : i32
    %c0_i32_0 = arith.constant 0 : i32
    %c0_i32_1 = arith.constant 0 : i32
    return %c0_i32, %c0_i32_0 : i32, i32
  }
  func.func @transform_3(%arg0: i32) -> (i32, i32) {
    %c0_i32 = arith.constant 0 : i32
    %c0_i32_0 = arith.constant 0 : i32
    %c0_i32_1 = arith.constant 0 : i32
    return %c0_i32, %c0_i32_0 : i32, i32
  }
  func.func @transform_4(%arg0: i32) -> (i32, i32) {
    %c0_i32 = arith.constant 0 : i32
    %c0_i32_0 = arith.constant 0 : i32
    %c0_i32_1 = arith.constant 0 : i32
    return %c0_i32, %c0_i32_0 : i32, i32
  }
  func.func @transform_5(%arg0: i32) -> (i32, i32) {
    %c0_i32 = arith.constant 0 : i32
    %c0_i32_0 = arith.constant 0 : i32
    return %arg0, %c0_i32 : i32, i32
  }
}

</mosaic_0001>

<llo_original>
// kernel: tpu_custom_call.1
$region0: #{tpu_custom_call.1}
  #allocation0 [shape = 'u32[]', space=smem, size = 0x4, offset = 0x4, fixed_abs, tag = 'smem constant byte address 0x4 - core index']
  #allocation1 [shape = 'u32[144,128]{1,0:T(1,128)}', space=vmem, size = 0x12000, scoped, tag = 'internal scratch']
  %s0 = inlined_call_operand.hbm [shape: bf16[8,128], index: 0, kind: input, shape index: {}]
  %s1 = inlined_call_operand.hbm [shape: bf16[128,128], index: 1, kind: input, shape index: {}]
  %s2 = inlined_call_operand.vmem [shape: f32[1,128], index: 2, kind: input, shape index: {}]
  %s3 = inlined_call_operand.hbm [shape: bf16[128,128], index: 3, kind: input, shape index: {}]
  %s4 = inlined_call_operand.vmem [shape: f32[1,128], index: 4, kind: input, shape index: {}]
  %s5 = inlined_call_operand.hbm [shape: f32[8,128], index: 5, kind: output, shape index: {}]
  %s6 = sld [smem:[#allocation0]]
  $region42: #{tpu_custom_call.1} parent=0
    _
  %s8 = ssub.s32 1, %s6
  %s9 = scalar_select 0, %s8, %s6
  $region1: #{tpu_custom_call.1} parent=0
    #allocation2 [shape = 'u8[2048]{0}', space=vmem, size = 0x800, scoped, tag = 'input window, operand 0, single buffered']
    #allocation3 [shape = 's32[1]{0}', space=sflag, size = 0x4, scoped, tag = 'scoped memory for tpu_custom_call.1']
    #allocation4 [shape = 's32[1]{0}', space=sflag, size = 0x4, scoped, tag = 'scoped memory for tpu_custom_call.1']
    #allocation5 [shape = 'u8[32768]{0}', space=vmem, size = 0x8000, scoped, tag = 'input window, operand 1, single buffered']
    #allocation6 [shape = 's32[1]{0}', space=sflag, size = 0x4, scoped, tag = 'scoped memory for tpu_custom_call.1']
    #allocation7 [shape = 'u8[32768]{0}', space=vmem, size = 0x8000, scoped, tag = 'input window, operand 3, single buffered']
    #allocation8 [shape = 'u8[4096]{0}', space=vmem, size = 0x1000, scoped, tag = 'output window, operand 0, single buffered']
    %10 = vsyncpa [#allocation3], 0
    %11 = vsyncpa [#allocation6], 0
    %12 = vsyncpa [#allocation4], 0
    // Predicated region
    $region2: #{tpu_custom_call.1} parent=1 // pred_check
      _
    $region3: #{tpu_custom_call.1} parent=1 // pred_check_branch
      %14 = sbr.rel (0) target = $region5
    $region4: #{tpu_custom_call.1} parent=1 // pred_region
      %s16 = ssub.s32 64, 64
      %17 = vsyncadd [#allocation3], %s16
      %s19 = sshll.u32 [#allocation2], 4
      %s20 = int_to_ptr.vmem [resolvable:$true] %s19
      %22 = dma.hbm_to_vmem [thread:$0]  %s0, 64, %s20, [#allocation3]
    $region5: #{tpu_custom_call.1} parent=1 // pred_fallthru
      _
    // Predicated region
    $region6: #{tpu_custom_call.1} parent=1 // pred_check
      _
    $region7: #{tpu_custom_call.1} parent=1 // pred_check_branch
      %24 = sbr.rel (0) target = $region9
    $region8: #{tpu_custom_call.1} parent=1 // pred_region
      %s26 = ssub.s32 1024, 1024
      %27 = vsyncadd [#allocation6], %s26
      %s28 = sshll.u32 [#allocation5], 4
      %s29 = int_to_ptr.vmem [resolvable:$true] %s28
      %34 = dma.hbm_to_vmem [thread:$0]  %s1, 1024, %s29, [#allocation6], 64, 64, 4
    $region9: #{tpu_custom_call.1} parent=1 // pred_fallthru
      _
    // Predicated region
    $region10: #{tpu_custom_call.1} parent=1 // pred_check
      _
    $region11: #{tpu_custom_call.1} parent=1 // pred_check_branch
      %36 = sbr.rel (0) target = $region13
    $region12: #{tpu_custom_call.1} parent=1 // pred_region
      _
    $region13: #{tpu_custom_call.1} parent=1 // pred_fallthru
      _
    // Predicated region
    $region14: #{tpu_custom_call.1} parent=1 // pred_check
      _
    $region15: #{tpu_custom_call.1} parent=1 // pred_check_branch
      %38 = sbr.rel (0) target = $region17
    $region16: #{tpu_custom_call.1} parent=1 // pred_region
      %s40 = ssub.s32 1024, 1024
      %41 = vsyncadd [#allocation6], %s40
      %s42 = sshll.u32 [#allocation7], 4
      %s43 = int_to_ptr.vmem [resolvable:$true] %s42
      %48 = dma.hbm_to_vmem [thread:$0]  %s3, 1024, %s43, [#allocation6], 64, 64, 4
    $region17: #{tpu_custom_call.1} parent=1 // pred_fallthru
      _
    // Predicated region
    $region18: #{tpu_custom_call.1} parent=1 // pred_check
      _
    $region19: #{tpu_custom_call.1} parent=1 // pred_check_branch
      %50 = sbr.rel (0) target = $region21
    $region20: #{tpu_custom_call.1} parent=1 // pred_region
      _
    $region21: #{tpu_custom_call.1} parent=1 // pred_fallthru
      _
    // Predicated region
    $region22: #{tpu_custom_call.1} parent=1 // pred_check
      _
    $region23: #{tpu_custom_call.1} parent=1 // pred_check_branch
      %52 = sbr.rel (0) target = $region25
    $region24: #{tpu_custom_call.1} parent=1 // pred_region
      %53 = dma.done [#allocation3], 64
    $region25: #{tpu_custom_call.1} parent=1 // pred_fallthru
      _
    // Predicated region
    $region26: #{tpu_custom_call.1} parent=1 // pred_check
      _
    $region27: #{tpu_custom_call.1} parent=1 // pred_check_branch
      %55 = sbr.rel (0) target = $region29
    $region28: #{tpu_custom_call.1} parent=1 // pred_region
      %56 = dma.done [#allocation6], 1024
    $region29: #{tpu_custom_call.1} parent=1 // pred_fallthru
      _
    // Predicated region
    $region30: #{tpu_custom_call.1} parent=1 // pred_check
      _
    $region31: #{tpu_custom_call.1} parent=1 // pred_check_branch
      %58 = sbr.rel (0) target = $region33
    $region32: #{tpu_custom_call.1} parent=1 // pred_region
      %59 = dma.done [#allocation6], 1024
    $region33: #{tpu_custom_call.1} parent=1 // pred_fallthru
      _
    %v61 = vld [vmem:[#allocation2] sm:$0xf]
    %v62 = vld [vmem:[#allocation5] sm:$0xf]
    %v63 = vld [vmem:[#allocation5 + $0x4] sm:$0xf]
    %v64 = vld [vmem:[#allocation5 + $0x8] sm:$0xf]
    %v65 = vld [vmem:[#allocation5 + $0xc] sm:$0xf]
    %v66 = vld [vmem:[#allocation5 + $0x10] sm:$0xf]
    %v67 = vld [vmem:[#allocation5 + $0x14] sm:$0xf]
    %v68 = vld [vmem:[#allocation5 + $0x18] sm:$0xf]
    %v69 = vld [vmem:[#allocation5 + $0x1c] sm:$0xf]
    %v70 = vld [vmem:[#allocation5 + $0x20] sm:$0xf]
    %v71 = vld [vmem:[#allocation5 + $0x24] sm:$0xf]
    %v72 = vld [vmem:[#allocation5 + $0x28] sm:$0xf]
    %v73 = vld [vmem:[#allocation5 + $0x2c] sm:$0xf]
    %v74 = vld [vmem:[#allocation5 + $0x30] sm:$0xf]
    %v75 = vld [vmem:[#allocation5 + $0x34] sm:$0xf]
    %v76 = vld [vmem:[#allocation5 + $0x38] sm:$0xf]
    %v77 = vld [vmem:[#allocation5 + $0x3c] sm:$0xf]
    %v78 = vld [vmem:[%s2] sm:$0x1]
    %v80 = vlaneseq
    %v81 = vshrl.u32 %v80, 7
    %v82 = vsub.s32 0, %v81
    %v83 = vrot.slane %v78, %v82
    %v101 = vunpack.c.l.b16 %v62
    %v102 = vunpack.c.l.b16 %v63
    %v103 = vunpack.c.l.b16 %v64
    %v104 = vunpack.c.l.b16 %v65
    %v105 = vunpack.c.l.b16 %v66
    %v106 = vunpack.c.l.b16 %v67
    %v107 = vunpack.c.l.b16 %v68
    %v108 = vunpack.c.l.b16 %v69
    %v109 = vunpack.c.l.b16 %v70
    %v110 = vunpack.c.l.b16 %v71
    %v111 = vunpack.c.l.b16 %v72
    %v112 = vunpack.c.l.b16 %v73
    %v113 = vunpack.c.l.b16 %v74
    %v114 = vunpack.c.l.b16 %v75
    %v115 = vunpack.c.l.b16 %v76
    %v116 = vunpack.c.l.b16 %v77
    %v117 = vpack.c.b16 %v102, %v101
    %v118 = vpack.c.b16 %v104, %v103
    %v119 = vpack.c.b16 %v106, %v105
    %v120 = vpack.c.b16 %v108, %v107
    %v121 = vpack.c.b16 %v110, %v109
    %v122 = vpack.c.b16 %v112, %v111
    %v123 = vpack.c.b16 %v114, %v113
    %v124 = vpack.c.b16 %v116, %v115
    %133 = vmatprep.subr.bf16.mxu0 0
    %134 = vmatpush1.bf16.msra.mxu0 %v117
    %135 = vmatprep.subr.bf16.mxu0 0
    %136 = vmatpush1.bf16.msra.mxu0 %v118
    %137 = vmatprep.subr.bf16.mxu0 0
    %138 = vmatpush1.bf16.msra.mxu0 %v119
    %139 = vmatprep.subr.bf16.mxu0 0
    %140 = vmatpush1.bf16.msra.mxu0 %v120
    %141 = vmatprep.subr.bf16.mxu0 0
    %142 = vmatpush1.bf16.msra.mxu0 %v121
    %143 = vmatprep.subr.bf16.mxu0 0
    %144 = vmatpush1.bf16.msra.mxu0 %v122
    %145 = vmatprep.subr.bf16.mxu0 0
    %146 = vmatpush1.bf16.msra.mxu0 %v123
    %147 = vmatprep.subr.bf16.mxu0 0
    %148 = vmatpush1.bf16.msra.mxu0 %v124
    %149 = vmatprep.subr.bf16.mxu0 0
    %150 = vmatpush1.bf16.msra.mxu0 0
    %151 = vmatprep.subr.bf16.mxu0 0
    %152 = vmatpush1.bf16.msra.mxu0 0
    %153 = vmatprep.subr.bf16.mxu0 0
    %154 = vmatpush1.bf16.msra.mxu0 0
    %155 = vmatprep.subr.bf16.mxu0 0
    %156 = vmatpush1.bf16.msra.mxu0 0
    %157 = vmatprep.subr.bf16.mxu0 0
    %158 = vmatpush1.bf16.msra.mxu0 0
    %159 = vmatprep.subr.bf16.mxu0 0
    %160 = vmatpush1.bf16.msra.mxu0 0
    %161 = vmatprep.subr.bf16.mxu0 0
    %162 = vmatpush1.bf16.msra.mxu0 0
    %163 = vmatprep.subr.bf16.mxu0 0
    %164 = vmatpush1.bf16.msra.mxu0 0
    %165 = vmatprep.mubr.bf16.mxu0 0
    %166 = vmatmul.mubr.bf16.gmra.mrb[0].mxu0 %v61
    %v167 = vpop.f32.mrb[0].mxu0
    %v168 = vadd.f32 %v83, %v167
    %v169 = vpop.f32.mrb[0].mxu0
    %v170 = vpop.f32.mrb[0].mxu0
    %v171 = vpop.f32.mrb[0].mxu0
    %172 = vdwg.mxu0
    %v173 = vmul.f32 %v168, 0.2
    %v174 = vmax.f32 %v168, %v173
    %v175 = vpack.c.bf16 %v174, %v174
    %v176 = vld [vmem:[#allocation7] sm:$0xf]
    %v177 = vld [vmem:[#allocation7 + $0x4] sm:$0xf]
    %v178 = vld [vmem:[#allocation7 + $0x8] sm:$0xf]
    %v179 = vld [vmem:[#allocation7 + $0xc] sm:$0xf]
    %v180 = vld [vmem:[#allocation7 + $0x10] sm:$0xf]
    %v181 = vld [vmem:[#allocation7 + $0x14] sm:$0xf]
    %v182 = vld [vmem:[#allocation7 + $0x18] sm:$0xf]
    %v183 = vld [vmem:[#allocation7 + $0x1c] sm:$0xf]
    %v184 = vld [vmem:[#allocation7 + $0x20] sm:$0xf]
    %v185 = vld [vmem:[#allocation7 + $0x24] sm:$0xf]
    %v186 = vld [vmem:[#allocation7 + $0x28] sm:$0xf]
    %v187 = vld [vmem:[#allocation7 + $0x2c] sm:$0xf]
    %v188 = vld [vmem:[#allocation7 + $0x30] sm:$0xf]
    %v189 = vld [vmem:[#allocation7 + $0x34] sm:$0xf]
    %v190 = vld [vmem:[#allocation7 + $0x38] sm:$0xf]
    %v191 = vld [vmem:[#allocation7 + $0x3c] sm:$0xf]
    %v192 = vld [vmem:[%s4] sm:$0x1]
    %v194 = vlaneseq
    %v195 = vshrl.u32 %v194, 7
    %v196 = vsub.s32 0, %v195
    %v197 = vrot.slane %v192, %v196
    %v215 = vunpack.c.l.b16 %v176
    %v216 = vunpack.c.l.b16 %v177
    %v217 = vunpack.c.l.b16 %v178
    %v218 = vunpack.c.l.b16 %v179
    %v219 = vunpack.c.l.b16 %v180
    %v220 = vunpack.c.l.b16 %v181
    %v221 = vunpack.c.l.b16 %v182
    %v222 = vunpack.c.l.b16 %v183
    %v223 = vunpack.c.l.b16 %v184
    %v224 = vunpack.c.l.b16 %v185
    %v225 = vunpack.c.l.b16 %v186
    %v226 = vunpack.c.l.b16 %v187
    %v227 = vunpack.c.l.b16 %v188
    %v228 = vunpack.c.l.b16 %v189
    %v229 = vunpack.c.l.b16 %v190
    %v230 = vunpack.c.l.b16 %v191
    %v231 = vpack.c.b16 %v216, %v215
    %v232 = vpack.c.b16 %v218, %v217
    %v233 = vpack.c.b16 %v220, %v219
    %v234 = vpack.c.b16 %v222, %v221
    %v235 = vpack.c.b16 %v224, %v223
    %v236 = vpack.c.b16 %v226, %v225
    %v237 = vpack.c.b16 %v228, %v227
    %v238 = vpack.c.b16 %v230, %v229
    %247 = vmatprep.subr.bf16.mxu0 0
    %248 = vmatpush1.bf16.msra.mxu0 %v231
    %249 = vmatprep.subr.bf16.mxu0 0
    %250 = vmatpush1.bf16.msra.mxu0 %v232
    %251 = vmatprep.subr.bf16.mxu0 0
    %252 = vmatpush1.bf16.msra.mxu0 %v233
    %253 = vmatprep.subr.bf16.mxu0 0
    %254 = vmatpush1.bf16.msra.mxu0 %v234
    %255 = vmatprep.subr.bf16.mxu0 0
    %256 = vmatpush1.bf16.msra.mxu0 %v235
    %257 = vmatprep.subr.bf16.mxu0 0
    %258 = vmatpush1.bf16.msra.mxu0 %v236
    %259 = vmatprep.subr.bf16.mxu0 0
    %260 = vmatpush1.bf16.msra.mxu0 %v237
    %261 = vmatprep.subr.bf16.mxu0 0
    %262 = vmatpush1.bf16.msra.mxu0 %v238
    %263 = vmatprep.subr.bf16.mxu0 0
    %264 = vmatpush1.bf16.msra.mxu0 0
    %265 = vmatprep.subr.bf16.mxu0 0
    %266 = vmatpush1.bf16.msra.mxu0 0
    %267 = vmatprep.subr.bf16.mxu0 0
    %268 = vmatpush1.bf16.msra.mxu0 0
    %269 = vmatprep.subr.bf16.mxu0 0
    %270 = vmatpush1.bf16.msra.mxu0 0
    %271 = vmatprep.subr.bf16.mxu0 0
    %272 = vmatpush1.bf16.msra.mxu0 0
    %273 = vmatprep.subr.bf16.mxu0 0
    %274 = vmatpush1.bf16.msra.mxu0 0
    %275 = vmatprep.subr.bf16.mxu0 0
    %276 = vmatpush1.bf16.msra.mxu0 0
    %277 = vmatprep.subr.bf16.mxu0 0
    %278 = vmatpush1.bf16.msra.mxu0 0
    %279 = vmatprep.mubr.bf16.mxu0 0
    %280 = vmatmul.mubr.bf16.gmra.mrb[0].mxu0 %v175
    %v281 = vpop.f32.mrb[0].mxu0
    %v282 = vadd.f32 %v197, %v281
    %v283 = vpop.f32.mrb[0].mxu0
    %v284 = vpop.f32.mrb[0].mxu0
    %v285 = vpop.f32.mrb[0].mxu0
    %286 = vdwg.mxu0
    %v287 = vmul.f32 %v282, 0.2
    %v288 = vmax.f32 %v282, %v287
    %289 = vst [vmem:[#allocation8] sm:$0xff] %v288
    // Predicated region
    $region34: #{tpu_custom_call.1} parent=1 // pred_check
      _
    $region35: #{tpu_custom_call.1} parent=1 // pred_check_branch
      %291 = sbr.rel (0) target = $region37
    $region36: #{tpu_custom_call.1} parent=1 // pred_region
      %s293 = ssub.s32 128, 128
      %294 = vsyncadd [#allocation4], %s293
      %s296 = sshll.u32 [#allocation8], 4
      %s297 = int_to_ptr.vmem [resolvable:$true] %s296
      %299 = dma.vmem_to_hbm [thread:$0]  %s297, 128, %s5, [#allocation4]
    $region37: #{tpu_custom_call.1} parent=1 // pred_fallthru
      _
    // Predicated region
    $region38: #{tpu_custom_call.1} parent=1 // pred_check
      _
    $region39: #{tpu_custom_call.1} parent=1 // pred_check_branch
      %301 = sbr.rel (0) target = $region41
    $region40: #{tpu_custom_call.1} parent=1 // pred_region
      %302 = dma.done [#allocation4], 128
    $region41: #{tpu_custom_call.1} parent=1 // pred_fallthru
      _
    %303 = vsyncpa [#allocation3], 1
    %304 = vsyncpa [#allocation6], 1
    %305 = vsyncpa [#allocation4], 1

// kernel: tpu_custom_call.1
$region0: #{tpu_custom_call.1}
  #allocation0 [shape = 'u32[]', space=smem, size = 0x4, offset = 0x4, fixed_abs, tag = 'smem constant byte address 0x4 - core index']
  #allocation1 [shape = 'u32[144,128]{1,0:T(1,128)}', space=vmem, size = 0x12000, scoped, tag = 'internal scratch']
  %s0 = inlined_call_operand.hbm [shape: bf16[8,128], index: 0, kind: input, shape index: {}]
  %s1 = inlined_call_operand.hbm [shape: bf16[128,128], index: 1, kind: input, shape index: {}]
  %s2 = inlined_call_operand.vmem [shape: f32[1,128], index: 2, kind: input, shape index: {}]
  %s3 = inlined_call_operand.hbm [shape: bf16[128,128], index: 3, kind: input, shape index: {}]
  %s4 = inlined_call_operand.vmem [shape: f32[1,128], index: 4, kind: input, shape index: {}]
  %s5 = inlined_call_operand.hbm [shape: f32[8,128], index: 5, kind: output, shape index: {}]
  %s6 = sld [smem:[#allocation0]]
  $region42: #{tpu_custom_call.1} parent=0
    _
  %s8 = ssub.s32 1, %s6
  %s9 = scalar_select 0, %s8, %s6
  $region1: #{tpu_custom_call.1} parent=0
    #allocation2 [shape = 'u8[2048]{0}', space=vmem, size = 0x800, scoped, tag = 'input window, operand 0, single buffered']
    #allocation3 [shape = 's32[1]{0}', space=sflag, size = 0x4, scoped, tag = 'scoped memory for tpu_custom_call.1']
    #allocation4 [shape = 's32[1]{0}', space=sflag, size = 0x4, scoped, tag = 'scoped memory for tpu_custom_call.1']
    #allocation5 [shape = 'u8[32768]{0}', space=vmem, size = 0x8000, scoped, tag = 'input window, operand 1, single buffered']
    #allocation6 [shape = 's32[1]{0}', space=sflag, size = 0x4, scoped, tag = 'scoped memory for tpu_custom_call.1']
    #allocation7 [shape = 'u8[32768]{0}', space=vmem, size = 0x8000, scoped, tag = 'input window, operand 3, single buffered']
    #allocation8 [shape = 'u8[4096]{0}', space=vmem, size = 0x1000, scoped, tag = 'output window, operand 0, single buffered']
    %10 = vsyncpa [#allocation3], 0
    %11 = vsyncpa [#allocation6], 0
    %12 = vsyncpa [#allocation4], 0
    // Predicated region
    $region2: #{tpu_custom_call.1} parent=1 // pred_check
      _
    $region3: #{tpu_custom_call.1} parent=1 // pred_check_branch
      %14 = sbr.rel (0) target = $region5
    $region4: #{tpu_custom_call.1} parent=1 // pred_region
      %s16 = ssub.s32 64, 64
      %17 = vsyncadd [#allocation3], %s16
      %s19 = sshll.u32 [#allocation2], 4
      %s20 = int_to_ptr.vmem [resolvable:$true] %s19
      %22 = dma.hbm_to_vmem [thread:$0]  %s0, 64, %s20, [#allocation3]
    $region5: #{tpu_custom_call.1} parent=1 // pred_fallthru
      _
    // Predicated region
    $region6: #{tpu_custom_call.1} parent=1 // pred_check
      _
    $region7: #{tpu_custom_call.1} parent=1 // pred_check_branch
      %24 = sbr.rel (0) target = $region9
    $region8: #{tpu_custom_call.1} parent=1 // pred_region
      %s26 = ssub.s32 1024, 1024
      %27 = vsyncadd [#allocation6], %s26
      %s28 = sshll.u32 [#allocation5], 4
      %s29 = int_to_ptr.vmem [resolvable:$true] %s28
      %34 = dma.hbm_to_vmem [thread:$0]  %s1, 1024, %s29, [#allocation6], 64, 64, 4
    $region9: #{tpu_custom_call.1} parent=1 // pred_fallthru
      _
    // Predicated region
    $region10: #{tpu_custom_call.1} parent=1 // pred_check
      _
    $region11: #{tpu_custom_call.1} parent=1 // pred_check_branch
      %36 = sbr.rel (0) target = $region13
    $region12: #{tpu_custom_call.1} parent=1 // pred_region
      _
    $region13: #{tpu_custom_call.1} parent=1 // pred_fallthru
      _
    // Predicated region
    $region14: #{tpu_custom_call.1} parent=1 // pred_check
      _
    $region15: #{tpu_custom_call.1} parent=1 // pred_check_branch
      %38 = sbr.rel (0) target = $region17
    $region16: #{tpu_custom_call.1} parent=1 // pred_region
      %s40 = ssub.s32 1024, 1024
      %41 = vsyncadd [#allocation6], %s40
      %s42 = sshll.u32 [#allocation7], 4
      %s43 = int_to_ptr.vmem [resolvable:$true] %s42
      %48 = dma.hbm_to_vmem [thread:$0]  %s3, 1024, %s43, [#allocation6], 64, 64, 4
    $region17: #{tpu_custom_call.1} parent=1 // pred_fallthru
      _
    // Predicated region
    $region18: #{tpu_custom_call.1} parent=1 // pred_check
      _
    $region19: #{tpu_custom_call.1} parent=1 // pred_check_branch
      %50 = sbr.rel (0) target = $region21
    $region20: #{tpu_custom_call.1} parent=1 // pred_region
      _
    $region21: #{tpu_custom_call.1} parent=1 // pred_fallthru
      _
    // Predicated region
    $region22: #{tpu_custom_call.1} parent=1 // pred_check
      _
    $region23: #{tpu_custom_call.1} parent=1 // pred_check_branch
      %52 = sbr.rel (0) target = $region25
    $region24: #{tpu_custom_call.1} parent=1 // pred_region
      %53 = dma.done [#allocation3], 64
    $region25: #{tpu_custom_call.1} parent=1 // pred_fallthru
      _
    // Predicated region
    $region26: #{tpu_custom_call.1} parent=1 // pred_check
      _
    $region27: #{tpu_custom_call.1} parent=1 // pred_check_branch
      %55 = sbr.rel (0) target = $region29
    $region28: #{tpu_custom_call.1} parent=1 // pred_region
      %56 = dma.done [#allocation6], 1024
    $region29: #{tpu_custom_call.1} parent=1 // pred_fallthru
      _
    // Predicated region
    $region30: #{tpu_custom_call.1} parent=1 // pred_check
      _
    $region31: #{tpu_custom_call.1} parent=1 // pred_check_branch
      %58 = sbr.rel (0) target = $region33
    $region32: #{tpu_custom_call.1} parent=1 // pred_region
      %59 = dma.done [#allocation6], 1024
    $region33: #{tpu_custom_call.1} parent=1 // pred_fallthru
      _
    %v61 = vld [vmem:[#allocation2] sm:$0xf]
    %v62 = vld [vmem:[#allocation5] sm:$0xf]
    %v63 = vld [vmem:[#allocation5 + $0x4] sm:$0xf]
    %v64 = vld [vmem:[#allocation5 + $0x8] sm:$0xf]
    %v65 = vld [vmem:[#allocation5 + $0xc] sm:$0xf]
    %v66 = vld [vmem:[#allocation5 + $0x10] sm:$0xf]
    %v67 = vld [vmem:[#allocation5 + $0x14] sm:$0xf]
    %v68 = vld [vmem:[#allocation5 + $0x18] sm:$0xf]
    %v69 = vld [vmem:[#allocation5 + $0x1c] sm:$0xf]
    %v70 = vld [vmem:[#allocation5 + $0x20] sm:$0xf]
    %v71 = vld [vmem:[#allocation5 + $0x24] sm:$0xf]
    %v72 = vld [vmem:[#allocation5 + $0x28] sm:$0xf]
    %v73 = vld [vmem:[#allocation5 + $0x2c] sm:$0xf]
    %v74 = vld [vmem:[#allocation5 + $0x30] sm:$0xf]
    %v75 = vld [vmem:[#allocation5 + $0x34] sm:$0xf]
    %v76 = vld [vmem:[#allocation5 + $0x38] sm:$0xf]
    %v77 = vld [vmem:[#allocation5 + $0x3c] sm:$0xf]
    %v78 = vld [vmem:[%s2] sm:$0x1]
    %v80 = vlaneseq
    %v81 = vshrl.u32 %v80, 7
    %v82 = vsub.s32 0, %v81
    %v83 = vrot.slane %v78, %v82
    %v101 = vunpack.c.l.b16 %v62
    %v102 = vunpack.c.l.b16 %v63
    %v103 = vunpack.c.l.b16 %v64
    %v104 = vunpack.c.l.b16 %v65
    %v105 = vunpack.c.l.b16 %v66
    %v106 = vunpack.c.l.b16 %v67
    %v107 = vunpack.c.l.b16 %v68
    %v108 = vunpack.c.l.b16 %v69
    %v109 = vunpack.c.l.b16 %v70
    %v110 = vunpack.c.l.b16 %v71
    %v111 = vunpack.c.l.b16 %v72
    %v112 = vunpack.c.l.b16 %v73
    %v113 = vunpack.c.l.b16 %v74
    %v114 = vunpack.c.l.b16 %v75
    %v115 = vunpack.c.l.b16 %v76
    %v116 = vunpack.c.l.b16 %v77
    %v117 = vpack.c.b16 %v102, %v101
    %v118 = vpack.c.b16 %v104, %v103
    %v119 = vpack.c.b16 %v106, %v105
    %v120 = vpack.c.b16 %v108, %v107
    %v121 = vpack.c.b16 %v110, %v109
    %v122 = vpack.c.b16 %v112, %v111
    %v123 = vpack.c.b16 %v114, %v113
    %v124 = vpack.c.b16 %v116, %v115
    %133 = vmatprep.subr.bf16.mxu0 0
    %134 = vmatpush1.bf16.msra.mxu0 %v117
    %135 = vmatprep.subr.bf16.mxu0 0
    %136 = vmatpush1.bf16.msra.mxu0 %v118
    %137 = vmatprep.subr.bf16.mxu0 0
    %138 = vmatpush1.bf16.msra.mxu0 %v119
    %139 = vmatprep.subr.bf16.mxu0 0
    %140 = vmatpush1.bf16.msra.mxu0 %v120
    %141 = vmatprep.subr.bf16.mxu0 0
    %142 = vmatpush1.bf16.msra.mxu0 %v121
    %143 = vmatprep.subr.bf16.mxu0 0
    %144 = vmatpush1.bf16.msra.mxu0 %v122
    %145 = vmatprep.subr.bf16.mxu0 0
    %146 = vmatpush1.bf16.msra.mxu0 %v123
    %147 = vmatprep.subr.bf16.mxu0 0
    %148 = vmatpush1.bf16.msra.mxu0 %v124
    %149 = vmatprep.subr.bf16.mxu0 0
    %150 = vmatpush1.bf16.msra.mxu0 0
    %151 = vmatprep.subr.bf16.mxu0 0
    %152 = vmatpush1.bf16.msra.mxu0 0
    %153 = vmatprep.subr.bf16.mxu0 0
    %154 = vmatpush1.bf16.msra.mxu0 0
    %155 = vmatprep.subr.bf16.mxu0 0
    %156 = vmatpush1.bf16.msra.mxu0 0
    %157 = vmatprep.subr.bf16.mxu0 0
    %158 = vmatpush1.bf16.msra.mxu0 0
    %159 = vmatprep.subr.bf16.mxu0 0
    %160 = vmatpush1.bf16.msra.mxu0 0
    %161 = vmatprep.subr.bf16.mxu0 0
    %162 = vmatpush1.bf16.msra.mxu0 0
    %163 = vmatprep.subr.bf16.mxu0 0
    %164 = vmatpush1.bf16.msra.mxu0 0
    %165 = vmatprep.mubr.bf16.mxu0 0
    %166 = vmatmul.mubr.bf16.gmra.mrb[0].mxu0 %v61
    %v167 = vpop.f32.mrb[0].mxu0
    %v168 = vadd.f32 %v83, %v167
    %v169 = vpop.f32.mrb[0].mxu0
    %v170 = vpop.f32.mrb[0].mxu0
    %v171 = vpop.f32.mrb[0].mxu0
    %172 = vdwg.mxu0
    %v173 = vmul.f32 %v168, 0.2
    %v174 = vmax.f32 %v168, %v173
    %v175 = vpack.c.bf16 %v174, %v174
    %v176 = vld [vmem:[#allocation7] sm:$0xf]
    %v177 = vld [vmem:[#allocation7 + $0x4] sm:$0xf]
    %v178 = vld [vmem:[#allocation7 + $0x8] sm:$0xf]
    %v179 = vld [vmem:[#allocation7 + $0xc] sm:$0xf]
    %v180 = vld [vmem:[#allocation7 + $0x10] sm:$0xf]
    %v181 = vld [vmem:[#allocation7 + $0x14] sm:$0xf]
    %v182 = vld [vmem:[#allocation7 + $0x18] sm:$0xf]
    %v183 = vld [vmem:[#allocation7 + $0x1c] sm:$0xf]
    %v184 = vld [vmem:[#allocation7 + $0x20] sm:$0xf]
    %v185 = vld [vmem:[#allocation7 + $0x24] sm:$0xf]
    %v186 = vld [vmem:[#allocation7 + $0x28] sm:$0xf]
    %v187 = vld [vmem:[#allocation7 + $0x2c] sm:$0xf]
    %v188 = vld [vmem:[#allocation7 + $0x30] sm:$0xf]
    %v189 = vld [vmem:[#allocation7 + $0x34] sm:$0xf]
    %v190 = vld [vmem:[#allocation7 + $0x38] sm:$0xf]
    %v191 = vld [vmem:[#allocation7 + $0x3c] sm:$0xf]
    %v192 = vld [vmem:[%s4] sm:$0x1]
    %v194 = vlaneseq
    %v195 = vshrl.u32 %v194, 7
    %v196 = vsub.s32 0, %v195
    %v197 = vrot.slane %v192, %v196
    %v215 = vunpack.c.l.b16 %v176
    %v216 = vunpack.c.l.b16 %v177
    %v217 = vunpack.c.l.b16 %v178
    %v218 = vunpack.c.l.b16 %v179
    %v219 = vunpack.c.l.b16 %v180
    %v220 = vunpack.c.l.b16 %v181
    %v221 = vunpack.c.l.b16 %v182
    %v222 = vunpack.c.l.b16 %v183
    %v223 = vunpack.c.l.b16 %v184
    %v224 = vunpack.c.l.b16 %v185
    %v225 = vunpack.c.l.b16 %v186
    %v226 = vunpack.c.l.b16 %v187
    %v227 = vunpack.c.l.b16 %v188
    %v228 = vunpack.c.l.b16 %v189
    %v229 = vunpack.c.l.b16 %v190
    %v230 = vunpack.c.l.b16 %v191
    %v231 = vpack.c.b16 %v216, %v215
    %v232 = vpack.c.b16 %v218, %v217
    %v233 = vpack.c.b16 %v220, %v219
    %v234 = vpack.c.b16 %v222, %v221
    %v235 = vpack.c.b16 %v224, %v223
    %v236 = vpack.c.b16 %v226, %v225
    %v237 = vpack.c.b16 %v228, %v227
    %v238 = vpack.c.b16 %v230, %v229
    %247 = vmatprep.subr.bf16.mxu0 0
    %248 = vmatpush1.bf16.msra.mxu0 %v231
    %249 = vmatprep.subr.bf16.mxu0 0
    %250 = vmatpush1.bf16.msra.mxu0 %v232
    %251 = vmatprep.subr.bf16.mxu0 0
    %252 = vmatpush1.bf16.msra.mxu0 %v233
    %253 = vmatprep.subr.bf16.mxu0 0
    %254 = vmatpush1.bf16.msra.mxu0 %v234
    %255 = vmatprep.subr.bf16.mxu0 0
    %256 = vmatpush1.bf16.msra.mxu0 %v235
    %257 = vmatprep.subr.bf16.mxu0 0
    %258 = vmatpush1.bf16.msra.mxu0 %v236
    %259 = vmatprep.subr.bf16.mxu0 0
    %260 = vmatpush1.bf16.msra.mxu0 %v237
    %261 = vmatprep.subr.bf16.mxu0 0
    %262 = vmatpush1.bf16.msra.mxu0 %v238
    %263 = vmatprep.subr.bf16.mxu0 0
    %264 = vmatpush1.bf16.msra.mxu0 0
    %265 = vmatprep.subr.bf16.mxu0 0
    %266 = vmatpush1.bf16.msra.mxu0 0
    %267 = vmatprep.subr.bf16.mxu0 0
    %268 = vmatpush1.bf16.msra.mxu0 0
    %269 = vmatprep.subr.bf16.mxu0 0
    %270 = vmatpush1.bf16.msra.mxu0 0
    %271 = vmatprep.subr.bf16.mxu0 0
    %272 = vmatpush1.bf16.msra.mxu0 0
    %273 = vmatprep.subr.bf16.mxu0 0
    %274 = vmatpush1.bf16.msra.mxu0 0
    %275 = vmatprep.subr.bf16.mxu0 0
    %276 = vmatpush1.bf16.msra.mxu0 0
    %277 = vmatprep.subr.bf16.mxu0 0
    %278 = vmatpush1.bf16.msra.mxu0 0
    %279 = vmatprep.mubr.bf16.mxu0 0
    %280 = vmatmul.mubr.bf16.gmra.mrb[0].mxu0 %v175
    %v281 = vpop.f32.mrb[0].mxu0
    %v282 = vadd.f32 %v197, %v281
    %v283 = vpop.f32.mrb[0].mxu0
    %v284 = vpop.f32.mrb[0].mxu0
    %v285 = vpop.f32.mrb[0].mxu0
    %286 = vdwg.mxu0
    %v287 = vmul.f32 %v282, 0.2
    %v288 = vmax.f32 %v282, %v287
    %289 = vst [vmem:[#allocation8] sm:$0xff] %v288
    // Predicated region
    $region34: #{tpu_custom_call.1} parent=1 // pred_check
      _
    $region35: #{tpu_custom_call.1} parent=1 // pred_check_branch
      %291 = sbr.rel (0) target = $region37
    $region36: #{tpu_custom_call.1} parent=1 // pred_region
      %s293 = ssub.s32 128, 128
      %294 = vsyncadd [#allocation4], %s293
      %s296 = sshll.u32 [#allocation8], 4
      %s297 = int_to_ptr.vmem [resolvable:$true] %s296
      %299 = dma.vmem_to_hbm [thread:$0]  %s297, 128, %s5, [#allocation4]
    $region37: #{tpu_custom_call.1} parent=1 // pred_fallthru
      _
    // Predicated region
    $region38: #{tpu_custom_call.1} parent=1 // pred_check
      _
    $region39: #{tpu_custom_call.1} parent=1 // pred_check_branch
      %301 = sbr.rel (0) target = $region41
    $region40: #{tpu_custom_call.1} parent=1 // pred_region
      %302 = dma.done [#allocation4], 128
    $region41: #{tpu_custom_call.1} parent=1 // pred_fallthru
      _
    %303 = vsyncpa [#allocation3], 1
    %304 = vsyncpa [#allocation6], 1
    %305 = vsyncpa [#allocation4], 1

</llo_original>
